<compile_context>
chip_gen: v7x
topology: tpu7x:2x2x1
jax: 0.10.0
libtpu: 0.0.40
codegen_flags: <defaults>
</compile_context>

<pallas_src>
import jax
import jax.numpy as jnp
import numpy as np
from jax import lax
from jax.experimental import pallas as pl
from jax.experimental.pallas import tpu as pltpu


def _make_kernel(batch, feat_dim, tile_b, num_tiles):
    tail_rows = batch - (num_tiles - 1) * tile_b   # valid rows in the last tile
    needs_mask = (tail_rows != tile_b)             # static Python bool
    lane_partial = (feat_dim % 128 == 0)           # static Python bool

    def kernel(t_ref, s_ref, o_ref):
        t = t_ref[...].astype(jnp.float32)
        s = s_ref[...].astype(jnp.float32)

        # L2-normalize along the feature (lane) axis via rsqrt on the squared norm.
        # max(sum_sq, 1e-24) == max(||x||, 1e-12) after the monotone sqrt, matching
        # F.normalize's eps handling (all-zero rows normalize to zero).
        eps_sq = jnp.float32(1e-24)
        inv_t = lax.rsqrt(jnp.maximum(jnp.sum(t * t, axis=1, keepdims=True), eps_sq))
        inv_s = lax.rsqrt(jnp.maximum(jnp.sum(s * s, axis=1, keepdims=True), eps_sq))

        # SmoothL1 (beta = 1.0) on the normalized difference.
        d = t * inv_t - s * inv_s
        ad = jnp.abs(d)
        per_elem = jnp.where(ad < jnp.float32(1.0),
                             jnp.float32(0.5) * d * d,
                             ad - jnp.float32(0.5))

        if needs_mask:
            # Rows past the true batch in the last tile are garbage (no pad copy
            # was made); zero their contribution. One compare + select on the VPU.
            i = pl.program_id(0)
            row_limit = jnp.where(i == num_tiles - 1,
                                  jnp.int32(tail_rows), jnp.int32(tile_b))
            row_ids = lax.broadcasted_iota(jnp.int32, (tile_b, 1), 0)
            per_elem = jnp.where(row_ids < row_limit, per_elem, jnp.float32(0.0))

        if lane_partial:
            # Lane/sublane-parallel (8,128) partial: leading-axis reshape is a free
            # split of the major dim; lane groups are folded with 128-aligned static
            # slices. Pure VALU tree adds — no XLU reduce, no scalar splat.
            acc = per_elem.reshape(tile_b // 8, 8, feat_dim).sum(axis=0)   # (8, D)
            out = acc[:, 0:128]
            for g in range(1, feat_dim // 128):
                out = out + acc[:, g * 128:(g + 1) * 128]
            o_ref[...] = out
        else:
            # Fallback for D not a multiple of 128: scalar partial spread evenly
            # over the (8,128) block so the dense epilogue sum stays exact.
            partial = jnp.sum(per_elem) * jnp.float32(1.0 / (8 * 128))
            o_ref[...] = jnp.full(o_ref.shape, partial, dtype=jnp.float32)

    return kernel


def _pick_tile_b(batch, feat_dim):
    """Batch tile: multiple of 8, ~1M-element input blocks (>=2-4 MiB), and >=2
    tiles on the parallel grid axis when the batch allows (v7x megacore)."""
    b8 = ((batch + 7) // 8) * 8
    target_elems = 1 << 20                          # ~4 MiB f32 / 2 MiB bf16 per block
    tile = max(8, (target_elems // max(feat_dim, 1)) // 8 * 8)
    tile = min(tile, b8)
    if b8 > 8:
        half = ((b8 // 2 + 7) // 8) * 8             # round8(ceil(b8/2)) -> >=2 tiles
        tile = min(tile, max(8, half))
    return max(8, tile)


def simreg_smoothl1(teacher_feature, student_feature, *, tile_b=None):
    """Pallas implementation of SimRegSmoothL1.forward. Inputs: (B, D)."""
    assert teacher_feature.shape == student_feature.shape
    assert teacher_feature.ndim == 2
    B, D = teacher_feature.shape
    itemsize = jnp.dtype(teacher_feature.dtype).itemsize

    # Tiny batches only: pad up to one 8-row tile (negligible copy) so the block
    # shape respects the (8,128) layout; masking + true-B mean keep the result exact.
    rows = B
    if B < 8:
        pad = ((0, 8 - B), (0, 0))
        teacher_feature = jnp.pad(teacher_feature, pad)
        student_feature = jnp.pad(student_feature, pad)
        rows = 8

    if tile_b is None:
        tile_b = _pick_tile_b(rows, D)
    tile_b = max(8, (int(tile_b) // 8) * 8)
    tile_b = min(tile_b, ((rows + 7) // 8) * 8)
    num_tiles = -(-rows // tile_b)

    kernel = _make_kernel(B, D, tile_b, num_tiles)

    cost = pl.CostEstimate(
        flops=13 * B * D,
        transcendentals=2 * B,
        bytes_accessed=2 * B * D * itemsize + num_tiles * 8 * 128 * 4,
    )

    partials = pl.pallas_call(
        kernel,
        out_shape=jax.ShapeDtypeStruct((num_tiles * 8, 128), jnp.float32),
        grid=(num_tiles,),
        in_specs=[
            pl.BlockSpec((tile_b, D), lambda i: (i, 0)),
            pl.BlockSpec((tile_b, D), lambda i: (i, 0)),
        ],
        out_specs=pl.BlockSpec((8, 128), lambda i: (i, 0)),
        compiler_params=pltpu.CompilerParams(
            dimension_semantics=("parallel",),
            vmem_limit_bytes=48 * 1024 * 1024,
        ),
        cost_estimate=cost,
    )(teacher_feature, student_feature)

    # Dense reduction over all (8,128) per-tile partials, then the mean over the
    # true element count B*D (single multiply by a precomputed reciprocal).
    return jnp.sum(partials) * jnp.float32(1.0 / (B * D))


def _reference(teacher_feature, student_feature):
    eps = 1e-12
    t = teacher_feature.astype(jnp.float32)
    s = student_feature.astype(jnp.float32)
    t_n = t / jnp.maximum(jnp.linalg.norm(t, axis=1, keepdims=True), eps)
    s_n = s / jnp.maximum(jnp.linalg.norm(s, axis=1, keepdims=True), eps)
    d = t_n - s_n
    ad = jnp.abs(d)
    return jnp.mean(jnp.where(ad < 1.0, 0.5 * d * d, ad - 0.5))


if __name__ == "__main__":
    key = jax.random.PRNGKey(0)
    ks = jax.random.split(key, 10)

    # Case 1: small aligned shape, single tile, no mask, lane-parallel partials.
    t1 = jax.random.normal(ks[0], (8, 128), dtype=jnp.float32)
    s1 = jax.random.normal(ks[1], (8, 128), dtype=jnp.float32)
    l1 = jax.block_until_ready(simreg_smoothl1(t1, s1))
    np.testing.assert_allclose(np.asarray(l1), np.asarray(_reference(t1, s1)),
                               rtol=1e-5, atol=1e-6)

    # Case 2: ragged batch, default tiling (2 tiles, masked tail, no pad copy).
    t2 = jax.random.normal(ks[2], (37, 256), dtype=jnp.float32)
    s2 = jax.random.normal(ks[3], (37, 256), dtype=jnp.float32)
    l2 = jax.block_until_ready(simreg_smoothl1(t2, s2))
    np.testing.assert_allclose(np.asarray(l2), np.asarray(_reference(t2, s2)),
                               rtol=1e-5, atol=1e-6)

    # Case 3: ragged batch with forced small tile — 3-tile parallel grid + masked tail.
    l3 = jax.block_until_ready(simreg_smoothl1(t2, s2, tile_b=16))
    np.testing.assert_allclose(np.asarray(l3), np.asarray(_reference(t2, s2)),
                               rtol=1e-5, atol=1e-6)

    # Case 4: feature dim not a multiple of 128 — scalar-partial fallback path.
    t4 = jax.random.normal(ks[4], (10, 96), dtype=jnp.float32)
    s4 = jax.random.normal(ks[5], (10, 96), dtype=jnp.float32)
    l4 = jax.block_until_ready(simreg_smoothl1(t4, s4))
    np.testing.assert_allclose(np.asarray(l4), np.asarray(_reference(t4, s4)),
                               rtol=1e-5, atol=1e-6)

    # Case 5: bf16 inputs (halves HBM traffic), f32 internal compute.
    t5 = jax.random.normal(ks[6], (16, 256), dtype=jnp.bfloat16)
    s5 = jax.random.normal(ks[7], (16, 256), dtype=jnp.bfloat16)
    l5 = jax.block_until_ready(simreg_smoothl1(t5, s5))
    np.testing.assert_allclose(np.asarray(l5), np.asarray(_reference(t5, s5)),
                               rtol=1e-5, atol=1e-6)

    print("KERNEL_OK")
</pallas_src>

<mosaic_0001>
module attributes {stable_mosaic.version = 11 : i64} {
  func.func @kernel(%arg0: i32, %arg1: memref<8x128xf32, #tpu.memory_space<vmem>>, %arg2: memref<8x128xf32, #tpu.memory_space<vmem>>, %arg3: memref<8x128xf32, #tpu.memory_space<vmem>>) attributes {dimension_semantics = [#tpu.dimension_semantics<parallel>], iteration_bounds = array<i64: 1>, scalar_prefetch = 0 : i64, scratch_operands = 0 : i64, tpu.core_type = #tpu.core_type<tc>, window_params = [{transform_indices = @transform_0, window_bounds = array<i64: 8, 128>}, {transform_indices = @transform_1, window_bounds = array<i64: 8, 128>}, {transform_indices = @transform_2, window_bounds = array<i64: 8, 128>}]} {
    %c0 = arith.constant 0 : index
    %c0_0 = arith.constant 0 : index
    %0 = vector.load %arg1[%c0, %c0_0] : memref<8x128xf32, #tpu.memory_space<vmem>>, vector<8x128xf32>
    %c0_1 = arith.constant 0 : index
    %c0_2 = arith.constant 0 : index
    %1 = vector.load %arg2[%c0_1, %c0_2] : memref<8x128xf32, #tpu.memory_space<vmem>>, vector<8x128xf32>
    %2 = arith.mulf %0, %0 : vector<8x128xf32>
    %cst = arith.constant dense<0.000000e+00> : vector<8xf32>
    %3 = vector.multi_reduction <add>, %2, %cst [1] : vector<8x128xf32> to vector<8xf32>
    %4 = vector.shape_cast %3 : vector<8xf32> to vector<8x1xf32>
    %cst_3 = arith.constant 1.000000e-24 : f32
    %5 = vector.broadcast %cst_3 : f32 to vector<8x1xf32>
    %6 = arith.maximumf %4, %5 : vector<8x1xf32>
    %7 = math.rsqrt %6 : vector<8x1xf32>
    %8 = arith.mulf %1, %1 : vector<8x128xf32>
    %cst_4 = arith.constant dense<0.000000e+00> : vector<8xf32>
    %9 = vector.multi_reduction <add>, %8, %cst_4 [1] : vector<8x128xf32> to vector<8xf32>
    %10 = vector.shape_cast %9 : vector<8xf32> to vector<8x1xf32>
    %cst_5 = arith.constant 1.000000e-24 : f32
    %11 = vector.broadcast %cst_5 : f32 to vector<8x1xf32>
    %12 = arith.maximumf %10, %11 : vector<8x1xf32>
    %13 = math.rsqrt %12 : vector<8x1xf32>
    %14 = vector.broadcast %7 : vector<8x1xf32> to vector<8x128xf32>
    %15 = arith.mulf %0, %14 : vector<8x128xf32>
    %16 = vector.broadcast %13 : vector<8x1xf32> to vector<8x128xf32>
    %17 = arith.mulf %1, %16 : vector<8x128xf32>
    %18 = arith.subf %15, %17 : vector<8x128xf32>
    %19 = math.absf %18 : vector<8x128xf32>
    %cst_6 = arith.constant 1.000000e+00 : f32
    %20 = vector.broadcast %cst_6 : f32 to vector<8x128xf32>
    %21 = arith.cmpf olt, %19, %20 : vector<8x128xf32>
    %cst_7 = arith.constant 5.000000e-01 : f32
    %22 = vector.broadcast %cst_7 : f32 to vector<8x128xf32>
    %23 = arith.mulf %22, %18 : vector<8x128xf32>
    %24 = arith.mulf %23, %18 : vector<8x128xf32>
    %cst_8 = arith.constant 5.000000e-01 : f32
    %25 = vector.broadcast %cst_8 : f32 to vector<8x128xf32>
    %26 = arith.subf %19, %25 : vector<8x128xf32>
    %27 = arith.select %21, %24, %26 : vector<8x128xi1>, vector<8x128xf32>
    %28 = vector.shape_cast %27 : vector<8x128xf32> to vector<1x8x128xf32>
    %cst_9 = arith.constant dense<0.000000e+00> : vector<8x128xf32>
    %29 = vector.multi_reduction <add>, %28, %cst_9 [0] : vector<1x8x128xf32> to vector<8x128xf32>
    %c0_10 = arith.constant 0 : index
    %c0_11 = arith.constant 0 : index
    %30 = vector.load %arg3[%c0_10, %c0_11] : memref<8x128xf32, #tpu.memory_space<vmem>>, vector<8x128xf32>
    tpu.vector_store %arg3[%c0_10, %c0_11], %29 {strides = array<i32>} : memref<8x128xf32, #tpu.memory_space<vmem>>, vector<8x128xf32>,
    return
  }
  func.func @transform_0(%arg0: i32) -> (i32, i32) {
    %c0_i32 = arith.constant 0 : i32
    %c0_i32_0 = arith.constant 0 : i32
    return %arg0, %c0_i32 : i32, i32
  }
  func.func @transform_1(%arg0: i32) -> (i32, i32) {
    %c0_i32 = arith.constant 0 : i32
    %c0_i32_0 = arith.constant 0 : i32
    return %arg0, %c0_i32 : i32, i32
  }
  func.func @transform_2(%arg0: i32) -> (i32, i32) {
    %c0_i32 = arith.constant 0 : i32
    %c0_i32_0 = arith.constant 0 : i32
    return %arg0, %c0_i32 : i32, i32
  }
}

</mosaic_0001>

<llo_original>
// kernel: tpu_custom_call.1
$region0: #{tpu_custom_call.1}
  #allocation0 [shape = 'u32[]', space=smem, size = 0x4, offset = 0x4, fixed_abs, tag = 'smem constant byte address 0x4 - core index']
  #allocation1 [shape = 'u32[144,128]{1,0:T(1,128)}', space=vmem, size = 0x12000, scoped, tag = 'internal scratch']
  %s0 = inlined_call_operand.hbm [shape: f32[8,128], index: 0, kind: input, shape index: {}]
  %s1 = inlined_call_operand.hbm [shape: f32[8,128], index: 1, kind: input, shape index: {}]
  %s2 = inlined_call_operand.hbm [shape: f32[8,128], index: 2, kind: output, shape index: {}]
  %s3 = sld [smem:[#allocation0]]
  $region26: #{tpu_custom_call.1} parent=0
    _
  %s5 = ssub.s32 1, %s3
  %s6 = scalar_select 0, %s5, %s3
  $region1: #{tpu_custom_call.1} parent=0
    #allocation2 [shape = 'u8[4096]{0}', space=vmem, size = 0x1000, scoped, tag = 'input window, operand 0, single buffered']
    #allocation3 [shape = 's32[1]{0}', space=sflag, size = 0x4, scoped, tag = 'scoped memory for tpu_custom_call.1']
    #allocation4 [shape = 's32[1]{0}', space=sflag, size = 0x4, scoped, tag = 'scoped memory for tpu_custom_call.1']
    #allocation5 [shape = 'u8[4096]{0}', space=vmem, size = 0x1000, scoped, tag = 'input window, operand 1, single buffered']
    #allocation6 [shape = 's32[1]{0}', space=sflag, size = 0x4, scoped, tag = 'scoped memory for tpu_custom_call.1']
    #allocation7 [shape = 'u8[4096]{0}', space=vmem, size = 0x1000, scoped, tag = 'output window, operand 0, single buffered']
    %7 = vsyncpa [#allocation3], 0
    %8 = vsyncpa [#allocation6], 0
    %9 = vsyncpa [#allocation4], 0
    // Predicated region
    $region2: #{tpu_custom_call.1} parent=1 // pred_check
      _
    $region3: #{tpu_custom_call.1} parent=1 // pred_check_branch
      %11 = sbr.rel (0) target = $region5
    $region4: #{tpu_custom_call.1} parent=1 // pred_region
      %s13 = ssub.s32 128, 128
      %14 = vsyncadd [#allocation3], %s13
      %s16 = sshll.u32 [#allocation2], 4
      %s17 = int_to_ptr.vmem [resolvable:$true] %s16
      %19 = dma.hbm_to_vmem [thread:$0]  %s0, 128, %s17, [#allocation3]
    $region5: #{tpu_custom_call.1} parent=1 // pred_fallthru
      _
    // Predicated region
    $region6: #{tpu_custom_call.1} parent=1 // pred_check
      _
    $region7: #{tpu_custom_call.1} parent=1 // pred_check_branch
      %21 = sbr.rel (0) target = $region9
    $region8: #{tpu_custom_call.1} parent=1 // pred_region
      %s23 = ssub.s32 128, 128
      %24 = vsyncadd [#allocation6], %s23
      %s26 = sshll.u32 [#allocation5], 4
      %s27 = int_to_ptr.vmem [resolvable:$true] %s26
      %29 = dma.hbm_to_vmem [thread:$0]  %s1, 128, %s27, [#allocation6]
    $region9: #{tpu_custom_call.1} parent=1 // pred_fallthru
      _
    // Predicated region
    $region10: #{tpu_custom_call.1} parent=1 // pred_check
      _
    $region11: #{tpu_custom_call.1} parent=1 // pred_check_branch
      %31 = sbr.rel (0) target = $region13
    $region12: #{tpu_custom_call.1} parent=1 // pred_region
      %32 = dma.done [#allocation3], 128
    $region13: #{tpu_custom_call.1} parent=1 // pred_fallthru
      _
    // Predicated region
    $region14: #{tpu_custom_call.1} parent=1 // pred_check
      _
    $region15: #{tpu_custom_call.1} parent=1 // pred_check_branch
      %34 = sbr.rel (0) target = $region17
    $region16: #{tpu_custom_call.1} parent=1 // pred_region
      %35 = dma.done [#allocation6], 128
    $region17: #{tpu_custom_call.1} parent=1 // pred_fallthru
      _
    %v36 = vld [vmem:[#allocation2] sm:$0xff]
    %v37 = vld [vmem:[#allocation5] sm:$0xff]
    %v38 = vmul.f32 %v36, %v36
    %39 = vadd.xlane.f32.xlu0 %v38
    %v40 = vpop.xlane.xlu0 %39
    %v41 = vmax.f32 %v40, 1e-24
    %v42 = vrsqrt.pop %v41
    %v43 = vmul.f32 %v37, %v37
    %44 = vadd.xlane.f32.xlu0 %v43
    %v45 = vpop.xlane.xlu0 %44
    %v46 = vmax.f32 %v45, 1e-24
    %v47 = vrsqrt.pop %v46
    %v48 = vmul.f32 %v36, %v42
    %v49 = vmul.f32 %v37, %v47
    %v50 = vsub.f32 %v48, %v49
    %v51 = vand.u32 2147483647, %v50
    %vm52 = vcmp.lt.f32.partialorder %v51, 1.0
    %v53 = vmul.f32 %v50, 0.5
    %v54 = vmul.f32 %v53, %v50
    %v55 = vsub.f32 %v51, 0.5
    %v56 = vsel %vm52, %v54, %v55
    %v57 = vadd.f32 %v56, 0.0
    %58 = vst [vmem:[#allocation7] sm:$0xff] %v57
    // Predicated region
    $region18: #{tpu_custom_call.1} parent=1 // pred_check
      _
    $region19: #{tpu_custom_call.1} parent=1 // pred_check_branch
      %60 = sbr.rel (0) target = $region21
    $region20: #{tpu_custom_call.1} parent=1 // pred_region
      %s62 = ssub.s32 128, 128
      %63 = vsyncadd [#allocation4], %s62
      %s65 = sshll.u32 [#allocation7], 4
      %s66 = int_to_ptr.vmem [resolvable:$true] %s65
      %68 = dma.vmem_to_hbm [thread:$0]  %s66, 128, %s2, [#allocation4]
    $region21: #{tpu_custom_call.1} parent=1 // pred_fallthru
      _
    // Predicated region
    $region22: #{tpu_custom_call.1} parent=1 // pred_check
      _
    $region23: #{tpu_custom_call.1} parent=1 // pred_check_branch
      %70 = sbr.rel (0) target = $region25
    $region24: #{tpu_custom_call.1} parent=1 // pred_region
      %71 = dma.done [#allocation4], 128
    $region25: #{tpu_custom_call.1} parent=1 // pred_fallthru
      _
    %72 = vsyncpa [#allocation3], 1
    %73 = vsyncpa [#allocation6], 1
    %74 = vsyncpa [#allocation4], 1

</llo_original>
